<compile_context>
chip_gen: v6e
topology: v6e:2x2x1
jax: 0.10.0
libtpu: 0.0.40
codegen_flags: <defaults>
</compile_context>

<pallas_src>
import jax
import jax.numpy as jnp
from jax.experimental import pallas as pl
from jax.experimental.pallas import tpu as pltpu

_LANE = 128
_SUBLANE = 8


def _round_up(x, m):
    return (x + m - 1) // m * m


def _sigmoid_eup(x):
    # sigmoid(x) == 0.5*(1 + tanh(0.5*x)): one EUP op instead of exp + recip.
    return 0.5 * (jnp.tanh(0.5 * x) + 1.0)


def _stacked_lstm_kernel(x_ref, h0_ref, c0_ref, w_ref, b_ref,
                         h1_ref, c1_ref, xh_scratch):
    """One grid step == one LSTM layer.

    x_ref      : (B_pad, Kin)              layer-0 input, VMEM-resident, f32
    h0_ref     : (1, B_pad, H_pad)         this layer's h_0, f32
    c0_ref     : (1, B_pad, H_pad)         this layer's c_0, f32
    w_ref      : (1, Kin + H_pad, 4*H_pad) [W_ih^T ; W_hh^T], zero-padded, bf16
    b_ref      : (L, 1, 4*H_pad)           combined bias, resident, f32
    h1_ref     : (1, B_pad, H_pad)         this layer's h_1 (output), f32
    c1_ref     : (1, B_pad, H_pad)         this layer's c_1 (output), f32
    xh_scratch : (B_pad, Kin + H_pad)      [layer input | h_0] staging buffer,
                 persists across grid steps and carries h between layers, f32
    """
    l = pl.program_id(0)
    num_layers = pl.num_programs(0)
    H = h1_ref.shape[-1]                 # H_pad (multiple of 128)
    Kin = xh_scratch.shape[-1] - H       # padded layer-input width

    # Layer 0 reads the external input; deeper layers reuse the h written
    # into xh_scratch[:, :H] at the end of the previous grid step.
    @pl.when(l == 0)
    def _():
        xh_scratch[:, :Kin] = x_ref[...]

    # Recurrent state for this layer.
    xh_scratch[:, Kin:] = h0_ref[0]
    c_prev = c0_ref[0]

    # One fused MXU matmul: [x | h] @ [W_ih^T ; W_hh^T] + (b_ih + b_hh).
    # Activations cast to bf16 to match the bf16 weight stream; f32 accumulate.
    gates = (jnp.dot(xh_scratch[...].astype(jnp.bfloat16), w_ref[0],
                     preferred_element_type=jnp.float32)
             + b_ref[l])

    # H is a multiple of 128, so every gate slice is lane-aligned.
    i_g = _sigmoid_eup(gates[:, 0 * H:1 * H])
    f_g = _sigmoid_eup(gates[:, 1 * H:2 * H])
    g_g = jnp.tanh(gates[:, 2 * H:3 * H])
    o_g = _sigmoid_eup(gates[:, 3 * H:4 * H])

    c_new = f_g * c_prev + i_g * g_g
    h_new = o_g * jnp.tanh(c_new)

    h1_ref[0] = h_new
    c1_ref[0] = c_new

    # Feed this layer's h to the next layer's input slot.  Columns [H:Kin]
    # (present only if input_size > hidden_size) still hold layer-0 input, but
    # the matching weight rows for layers > 0 are zero-padded, so they
    # contribute nothing.
    @pl.when(l + 1 < num_layers)
    def _():
        xh_scratch[:, :H] = h_new


def _vmem_limit_bytes(L, B_pad, H_pad, Kin):
    """Hardware-aware VMEM budget: one 2x for double buffering, ~80% phys cap."""
    G_pad = 4 * H_pad
    w_block = (Kin + H_pad) * G_pad * 2            # bf16 weight block
    state_blocks = 4 * B_pad * H_pad * 4           # h0, c0, h1, c1 (f32)
    resident = (B_pad * Kin + L * G_pad + B_pad * (Kin + H_pad)) * 4
    vmem_est = 2 * (w_block + state_blocks) + resident
    try:
        phys = pltpu.get_tpu_info().vmem_capacity_bytes
    except Exception:                              # emulator / unknown target
        phys = 64 << 20
    cap = int(0.8 * phys)
    return int(min(max(int(1.25 * vmem_est), 4 << 20), cap))


@jax.jit
def stacked_lstm_forward_padded(x_pad, h0_pad, c0_pad, w_cat, b_cat):
    """Padded-layout forward: the persistent-state entry point for decode loops.

    x_pad  : (B_pad, Kin)             f32
    h0_pad : (L, B_pad, H_pad)        f32
    c0_pad : (L, B_pad, H_pad)        f32
    w_cat  : (L, Kin + H_pad, 4*H_pad) bf16
    b_cat  : (L, 1, 4*H_pad)          f32
    Returns (out_pad, (h1_pad, c1_pad)) in the same padded layout.
    """
    L, B_pad, H_pad = h0_pad.shape
    Kin = w_cat.shape[1] - H_pad
    G_pad = 4 * H_pad
    assert x_pad.shape == (B_pad, Kin)
    assert w_cat.shape == (L, Kin + H_pad, G_pad)
    assert b_cat.shape == (L, 1, G_pad)

    vmem_limit = _vmem_limit_bytes(L, B_pad, H_pad, Kin)

    h1_pad, c1_pad = pl.pallas_call(
        _stacked_lstm_kernel,
        out_shape=(
            jax.ShapeDtypeStruct((L, B_pad, H_pad), jnp.float32),
            jax.ShapeDtypeStruct((L, B_pad, H_pad), jnp.float32),
        ),
        grid_spec=pltpu.PrefetchScalarGridSpec(
            num_scalar_prefetch=0,
            grid=(L,),
            in_specs=[
                pl.BlockSpec((B_pad, Kin), lambda l: (0, 0)),            # x (resident)
                pl.BlockSpec((1, B_pad, H_pad), lambda l: (l, 0, 0)),    # h0[l]
                pl.BlockSpec((1, B_pad, H_pad), lambda l: (l, 0, 0)),    # c0[l]
                pl.BlockSpec((1, Kin + H_pad, G_pad), lambda l: (l, 0, 0)),  # W_cat[l]
                pl.BlockSpec((L, 1, G_pad), lambda l: (0, 0, 0)),        # bias (resident)
            ],
            out_specs=(
                pl.BlockSpec((1, B_pad, H_pad), lambda l: (l, 0, 0)),    # h1[l]
                pl.BlockSpec((1, B_pad, H_pad), lambda l: (l, 0, 0)),    # c1[l]
            ),
            scratch_shapes=[pltpu.VMEM((B_pad, Kin + H_pad), jnp.float32)],
        ),
        compiler_params=pltpu.CompilerParams(
            dimension_semantics=("arbitrary",),    # layers are sequential
            vmem_limit_bytes=vmem_limit,
        ),
        input_output_aliases={1: 0, 2: 1},         # reuse h0/c0 buffers for h1/c1
    )(x_pad, h0_pad, c0_pad, w_cat, b_cat)

    return h1_pad[-1], (h1_pad, c1_pad)


def stacked_lstm_forward(x, hidden, packed_params):
    """Pallas equivalent of StackedLSTM.forward (eval-mode dropout = identity).

    Convenience wrapper for one-off calls: pads once, slices once.  In a decode
    loop, keep state padded and call stacked_lstm_forward_padded directly.
    """
    w_cat, b_cat = packed_params
    h0, c0 = hidden
    L, B, H = h0.shape
    D = x.shape[-1]
    B_pad = _round_up(B, _SUBLANE)
    H_pad = _round_up(H, _LANE)
    Kin = w_cat.shape[1] - H_pad

    x_pad = jnp.zeros((B_pad, Kin), jnp.float32).at[:B, :D].set(x)
    h0_pad = jnp.zeros((L, B_pad, H_pad), jnp.float32).at[:, :B, :H].set(h0)
    c0_pad = jnp.zeros((L, B_pad, H_pad), jnp.float32).at[:, :B, :H].set(c0)

    _, (h1_pad, c1_pad) = stacked_lstm_forward_padded(x_pad, h0_pad, c0_pad,
                                                      w_cat, b_cat)
    h1 = h1_pad[:, :B, :H]
    c1 = c1_pad[:, :B, :H]
    return h1[-1], (h1, c1)


def init_stacked_lstm_params(key, num_layers, input_size, hidden_size):
    """PyTorch-layout LSTMCell params: per layer (W_ih, W_hh, b_ih, b_hh)."""
    params = []
    bound = 1.0 / (hidden_size ** 0.5)
    in_sz = input_size
    for _ in range(num_layers):
        key, k1, k2, k3, k4 = jax.random.split(key, 5)
        w_ih = jax.random.uniform(k1, (4 * hidden_size, in_sz),
                                  jnp.float32, -bound, bound)
        w_hh = jax.random.uniform(k2, (4 * hidden_size, hidden_size),
                                  jnp.float32, -bound, bound)
        b_ih = jax.random.uniform(k3, (4 * hidden_size,),
                                  jnp.float32, -bound, bound)
        b_hh = jax.random.uniform(k4, (4 * hidden_size,),
                                  jnp.float32, -bound, bound)
        params.append((w_ih, w_hh, b_ih, b_hh))
        in_sz = hidden_size
    return params


def pack_stacked_lstm_params(raw_params, input_size, hidden_size):
    """Build the fused, lane/sublane-padded weight layout the kernel expects.

    Returns:
      w_cat : (L, Kin + H_pad, 4*H_pad)  [W_ih^T ; W_hh^T], zero-padded, bf16
      b_cat : (L, 1, 4*H_pad)            b_ih + b_hh, per-gate zero-padded, f32
    Padded gate columns produce h = c = 0 exactly, so padding never leaks.
    """
    H = hidden_size
    H_pad = _round_up(H, _LANE)
    Kin = _round_up(max(input_size, H), _LANE)
    G_pad = 4 * H_pad
    w_blocks, b_blocks = [], []
    for (w_ih, w_hh, b_ih, b_hh) in raw_params:
        in_sz = w_ih.shape[1]
        w_ih_t = w_ih.T.reshape(in_sz, 4, H)          # (in, gate, H)
        w_hh_t = w_hh.T.reshape(H, 4, H)
        w_ih_p = jnp.zeros((Kin, 4, H_pad), jnp.float32).at[:in_sz, :, :H].set(w_ih_t)
        w_hh_p = jnp.zeros((H_pad, 4, H_pad), jnp.float32).at[:H, :, :H].set(w_hh_t)
        w_cat = jnp.concatenate([w_ih_p, w_hh_p], axis=0).reshape(Kin + H_pad, G_pad)
        b = (b_ih + b_hh).reshape(4, H)
        b_p = jnp.zeros((4, H_pad), jnp.float32).at[:, :H].set(b).reshape(1, G_pad)
        w_blocks.append(w_cat)
        b_blocks.append(b_p)
    return jnp.stack(w_blocks).astype(jnp.bfloat16), jnp.stack(b_blocks)


def _reference_forward(x, hidden, raw_params):
    """Pure-JAX f32 reference (PyTorch layout) for correctness check."""
    h0, c0 = hidden
    h1, c1 = [], []
    inp = x
    for i, (w_ih, w_hh, b_ih, b_hh) in enumerate(raw_params):
        H = w_hh.shape[1]
        gates = inp @ w_ih.T + h0[i] @ w_hh.T + b_ih + b_hh
        i_g = jax.nn.sigmoid(gates[:, 0 * H:1 * H])
        f_g = jax.nn.sigmoid(gates[:, 1 * H:2 * H])
        g_g = jnp.tanh(gates[:, 2 * H:3 * H])
        o_g = jax.nn.sigmoid(gates[:, 3 * H:4 * H])
        c_new = f_g * c0[i] + i_g * g_g
        h_new = o_g * jnp.tanh(c_new)
        inp = h_new
        h1.append(h_new)
        c1.append(c_new)
    return inp, (jnp.stack(h1), jnp.stack(c1))


if __name__ == "__main__":
    num_layers = 2
    input_size = 16
    hidden_size = 32
    batch = 2

    key = jax.random.PRNGKey(0)
    kx, kh, kc, kp = jax.random.split(key, 4)

    x = jax.random.normal(kx, (batch, input_size), jnp.float32)
    h0 = jax.random.normal(kh, (num_layers, batch, hidden_size), jnp.float32)
    c0 = jax.random.normal(kc, (num_layers, batch, hidden_size), jnp.float32)

    raw_params = init_stacked_lstm_params(kp, num_layers, input_size, hidden_size)
    packed = pack_stacked_lstm_params(raw_params, input_size, hidden_size)

    out, (h1, c1) = stacked_lstm_forward(x, (h0, c0), packed)
    out = jax.block_until_ready(out)
    h1 = jax.block_until_ready(h1)
    c1 = jax.block_until_ready(c1)

    # Tolerance loosened vs. f32 reference because weights / activations go
    # through the MXU in bf16 (expected, not a bug).
    ref_out, (ref_h1, ref_c1) = _reference_forward(x, (h0, c0), raw_params)
    assert jnp.allclose(out, ref_out, atol=3e-2, rtol=3e-2)
    assert jnp.allclose(h1, ref_h1, atol=3e-2, rtol=3e-2)
    assert jnp.allclose(c1, ref_c1, atol=3e-2, rtol=3e-2)

    print("KERNEL_OK")
</pallas_src>

<mosaic_0001>
module attributes {stable_mosaic.version = 11 : i64} {
  func.func @_stacked_lstm_kernel(%arg0: i32, %arg1: memref<8x128xf32, #tpu.memory_space<vmem>>, %arg2: memref<1x8x128xf32, #tpu.memory_space<vmem>>, %arg3: memref<1x8x128xf32, #tpu.memory_space<vmem>>, %arg4: memref<1x256x512xbf16, #tpu.memory_space<vmem>>, %arg5: memref<2x1x512xf32, #tpu.memory_space<vmem>>, %arg6: memref<1x8x128xf32, #tpu.memory_space<vmem>>, %arg7: memref<1x8x128xf32, #tpu.memory_space<vmem>>, %arg8: memref<8x256xf32, #tpu.memory_space<vmem>>) attributes {dimension_semantics = [#tpu.dimension_semantics<arbitrary>], iteration_bounds = array<i64: 2>, scalar_prefetch = 0 : i64, scratch_operands = 1 : i64, tpu.core_type = #tpu.core_type<tc>, window_params = [{pipeline_mode = #tpu.pipeline_mode<synchronous>, transform_indices = @transform_0, window_bounds = array<i64: 8, 128>}, {transform_indices = @transform_1, window_bounds = array<i64: 1, 8, 128>}, {transform_indices = @transform_2, window_bounds = array<i64: 1, 8, 128>}, {transform_indices = @transform_3, window_bounds = array<i64: 1, 256, 512>}, {pipeline_mode = #tpu.pipeline_mode<synchronous>, transform_indices = @transform_4, window_bounds = array<i64: 2, 1, 512>}, {transform_indices = @transform_5, window_bounds = array<i64: 1, 8, 128>}, {transform_indices = @transform_6, window_bounds = array<i64: 1, 8, 128>}]} {
    %c0_i32 = arith.constant 0 : i32
    %0 = arith.cmpi eq, %arg0, %c0_i32 : i32
    %1 = arith.extui %0 : i1 to i32
    %c0_i32_0 = arith.constant 0 : i32
    %2 = arith.cmpi ne, %1, %c0_i32_0 : i32
    scf.if %2 {
      %c0_30 = arith.constant 0 : index
      %c0_31 = arith.constant 0 : index
      %59 = vector.load %arg1[%c0_30, %c0_31] : memref<8x128xf32, #tpu.memory_space<vmem>>, vector<8x128xf32>
      %c0_32 = arith.constant 0 : index
      %c0_33 = arith.constant 0 : index
      %60 = vector.load %arg8[%c0_32, %c0_33] : memref<8x256xf32, #tpu.memory_space<vmem>>, vector<8x128xf32>
      tpu.vector_store %arg8[%c0_32, %c0_33], %59 {strides = array<i32>} : memref<8x256xf32, #tpu.memory_space<vmem>>, vector<8x128xf32>,
    } else {
    }
    %c0 = arith.constant 0 : index
    %c0_1 = arith.constant 0 : index
    %c0_2 = arith.constant 0 : index
    %3 = vector.load %arg2[%c0, %c0_1, %c0_2] : memref<1x8x128xf32, #tpu.memory_space<vmem>>, vector<1x8x128xf32>
    %4 = vector.shape_cast %3 : vector<1x8x128xf32> to vector<8x128xf32>
    %c0_3 = arith.constant 0 : index
    %c128 = arith.constant 128 : index
    %5 = vector.load %arg8[%c0_3, %c128] : memref<8x256xf32, #tpu.memory_space<vmem>>, vector<8x128xf32>
    tpu.vector_store %arg8[%c0_3, %c128], %4 {strides = array<i32>} : memref<8x256xf32, #tpu.memory_space<vmem>>, vector<8x128xf32>,
    %c0_4 = arith.constant 0 : index
    %c0_5 = arith.constant 0 : index
    %c0_6 = arith.constant 0 : index
    %6 = vector.load %arg3[%c0_4, %c0_5, %c0_6] : memref<1x8x128xf32, #tpu.memory_space<vmem>>, vector<1x8x128xf32>
    %7 = vector.shape_cast %6 : vector<1x8x128xf32> to vector<8x128xf32>
    %c0_7 = arith.constant 0 : index
    %c0_8 = arith.constant 0 : index
    %8 = vector.load %arg8[%c0_7, %c0_8] : memref<8x256xf32, #tpu.memory_space<vmem>>, vector<8x256xf32>
    %9 = arith.truncf %8 : vector<8x256xf32> to vector<8x256xbf16>
    %c0_9 = arith.constant 0 : index
    %c0_10 = arith.constant 0 : index
    %c0_11 = arith.constant 0 : index
    %10 = vector.load %arg4[%c0_9, %c0_10, %c0_11] : memref<1x256x512xbf16, #tpu.memory_space<vmem>>, vector<1x256x512xbf16>
    %11 = vector.shape_cast %10 : vector<1x256x512xbf16> to vector<256x512xbf16>
    %cst = arith.constant dense<0.000000e+00> : vector<8x512xf32>
    %12 = tpu.matmul %9, %11, %cst {dimension_numbers = #tpu.dot_dimension_numbers<[1], [0], [0], [1], [0, 0, 1, 1], [], []>} : vector<8x256xbf16>, vector<256x512xbf16>, vector<8x512xf32> -> vector<8x512xf32>
    %13 = arith.index_cast %arg0 : i32 to index
    %c0_12 = arith.constant 0 : index
    %c0_13 = arith.constant 0 : index
    %14 = vector.load %arg5[%13, %c0_12, %c0_13] : memref<2x1x512xf32, #tpu.memory_space<vmem>>, vector<1x1x512xf32>
    %15 = vector.shape_cast %14 : vector<1x1x512xf32> to vector<1x512xf32>
    %16 = vector.broadcast %15 : vector<1x512xf32> to vector<8x512xf32>
    %17 = arith.addf %12, %16 : vector<8x512xf32>
    %18 = vector.extract_strided_slice %17 {offsets = [0, 0], sizes = [8, 128], strides = [1, 1]} : vector<8x512xf32> to vector<8x128xf32>
    %cst_14 = arith.constant 5.000000e-01 : f32
    %19 = vector.broadcast %cst_14 : f32 to vector<8x128xf32>
    %20 = arith.mulf %19, %18 : vector<8x128xf32>
    %21 = math.tanh %20 : vector<8x128xf32>
    %cst_15 = arith.constant 1.000000e+00 : f32
    %22 = vector.broadcast %cst_15 : f32 to vector<8x128xf32>
    %23 = arith.addf %21, %22 : vector<8x128xf32>
    %cst_16 = arith.constant 5.000000e-01 : f32
    %24 = vector.broadcast %cst_16 : f32 to vector<8x128xf32>
    %25 = arith.mulf %24, %23 : vector<8x128xf32>
    %26 = vector.extract_strided_slice %17 {offsets = [0, 128], sizes = [8, 128], strides = [1, 1]} : vector<8x512xf32> to vector<8x128xf32>
    %cst_17 = arith.constant 5.000000e-01 : f32
    %27 = vector.broadcast %cst_17 : f32 to vector<8x128xf32>
    %28 = arith.mulf %27, %26 : vector<8x128xf32>
    %29 = math.tanh %28 : vector<8x128xf32>
    %cst_18 = arith.constant 1.000000e+00 : f32
    %30 = vector.broadcast %cst_18 : f32 to vector<8x128xf32>
    %31 = arith.addf %29, %30 : vector<8x128xf32>
    %cst_19 = arith.constant 5.000000e-01 : f32
    %32 = vector.broadcast %cst_19 : f32 to vector<8x128xf32>
    %33 = arith.mulf %32, %31 : vector<8x128xf32>
    %34 = vector.extract_strided_slice %17 {offsets = [0, 256], sizes = [8, 128], strides = [1, 1]} : vector<8x512xf32> to vector<8x128xf32>
    %35 = math.tanh %34 : vector<8x128xf32>
    %36 = vector.extract_strided_slice %17 {offsets = [0, 384], sizes = [8, 128], strides = [1, 1]} : vector<8x512xf32> to vector<8x128xf32>
    %cst_20 = arith.constant 5.000000e-01 : f32
    %37 = vector.broadcast %cst_20 : f32 to vector<8x128xf32>
    %38 = arith.mulf %37, %36 : vector<8x128xf32>
    %39 = math.tanh %38 : vector<8x128xf32>
    %cst_21 = arith.constant 1.000000e+00 : f32
    %40 = vector.broadcast %cst_21 : f32 to vector<8x128xf32>
    %41 = arith.addf %39, %40 : vector<8x128xf32>
    %cst_22 = arith.constant 5.000000e-01 : f32
    %42 = vector.broadcast %cst_22 : f32 to vector<8x128xf32>
    %43 = arith.mulf %42, %41 : vector<8x128xf32>
    %44 = arith.mulf %33, %7 : vector<8x128xf32>
    %45 = arith.mulf %25, %35 : vector<8x128xf32>
    %46 = arith.addf %44, %45 : vector<8x128xf32>
    %47 = math.tanh %46 : vector<8x128xf32>
    %48 = arith.mulf %43, %47 : vector<8x128xf32>
    %c0_23 = arith.constant 0 : index
    %c0_24 = arith.constant 0 : index
    %c0_25 = arith.constant 0 : index
    %49 = vector.load %arg6[%c0_23, %c0_24, %c0_25] : memref<1x8x128xf32, #tpu.memory_space<vmem>>, vector<1x8x128xf32>
    %50 = vector.shape_cast %49 : vector<1x8x128xf32> to vector<8x128xf32>
    %51 = vector.shape_cast %48 : vector<8x128xf32> to vector<1x8x128xf32>
    tpu.vector_store %arg6[%c0_23, %c0_24, %c0_25], %51 {strides = array<i32>} : memref<1x8x128xf32, #tpu.memory_space<vmem>>, vector<1x8x128xf32>,
    %c0_26 = arith.constant 0 : index
    %c0_27 = arith.constant 0 : index
    %c0_28 = arith.constant 0 : index
    %52 = vector.load %arg7[%c0_26, %c0_27, %c0_28] : memref<1x8x128xf32, #tpu.memory_space<vmem>>, vector<1x8x128xf32>
    %53 = vector.shape_cast %52 : vector<1x8x128xf32> to vector<8x128xf32>
    %54 = vector.shape_cast %46 : vector<8x128xf32> to vector<1x8x128xf32>
    tpu.vector_store %arg7[%c0_26, %c0_27, %c0_28], %54 {strides = array<i32>} : memref<1x8x128xf32, #tpu.memory_space<vmem>>, vector<1x8x128xf32>,
    %c1_i32 = arith.constant 1 : i32
    %55 = arith.addi %arg0, %c1_i32 : i32
    %c2_i32 = arith.constant 2 : i32
    %56 = arith.cmpi slt, %55, %c2_i32 : i32
    %57 = arith.extui %56 : i1 to i32
    %c0_i32_29 = arith.constant 0 : i32
    %58 = arith.cmpi ne, %57, %c0_i32_29 : i32
    scf.if %58 {
      %c0_30 = arith.constant 0 : index
      %c0_31 = arith.constant 0 : index
      %59 = vector.load %arg8[%c0_30, %c0_31] : memref<8x256xf32, #tpu.memory_space<vmem>>, vector<8x128xf32>
      tpu.vector_store %arg8[%c0_30, %c0_31], %48 {strides = array<i32>} : memref<8x256xf32, #tpu.memory_space<vmem>>, vector<8x128xf32>,
    } else {
    }
    return
  }
  func.func @transform_0(%arg0: i32) -> (i32, i32) {
    %c0_i32 = arith.constant 0 : i32
    %c0_i32_0 = arith.constant 0 : i32
    %c0_i32_1 = arith.constant 0 : i32
    return %c0_i32, %c0_i32_0 : i32, i32
  }
  func.func @transform_1(%arg0: i32) -> (i32, i32, i32) {
    %c0_i32 = arith.constant 0 : i32
    %c0_i32_0 = arith.constant 0 : i32
    %c0_i32_1 = arith.constant 0 : i32
    return %arg0, %c0_i32, %c0_i32_0 : i32, i32, i32
  }
  func.func @transform_2(%arg0: i32) -> (i32, i32, i32) {
    %c0_i32 = arith.constant 0 : i32
    %c0_i32_0 = arith.constant 0 : i32
    %c0_i32_1 = arith.constant 0 : i32
    return %arg0, %c0_i32, %c0_i32_0 : i32, i32, i32
  }
  func.func @transform_3(%arg0: i32) -> (i32, i32, i32) {
    %c0_i32 = arith.constant 0 : i32
    %c0_i32_0 = arith.constant 0 : i32
    %c0_i32_1 = arith.constant 0 : i32
    return %arg0, %c0_i32, %c0_i32_0 : i32, i32, i32
  }
  func.func @transform_4(%arg0: i32) -> (i32, i32, i32) {
    %c0_i32 = arith.constant 0 : i32
    %c0_i32_0 = arith.constant 0 : i32
    %c0_i32_1 = arith.constant 0 : i32
    %c0_i32_2 = arith.constant 0 : i32
    return %c0_i32, %c0_i32_0, %c0_i32_1 : i32, i32, i32
  }
  func.func @transform_5(%arg0: i32) -> (i32, i32, i32) {
    %c0_i32 = arith.constant 0 : i32
    %c0_i32_0 = arith.constant 0 : i32
    %c0_i32_1 = arith.constant 0 : i32
    return %arg0, %c0_i32, %c0_i32_0 : i32, i32, i32
  }
  func.func @transform_6(%arg0: i32) -> (i32, i32, i32) {
    %c0_i32 = arith.constant 0 : i32
    %c0_i32_0 = arith.constant 0 : i32
    %c0_i32_1 = arith.constant 0 : i32
    return %arg0, %c0_i32, %c0_i32_0 : i32, i32, i32
  }
}

</mosaic_0001>

<llo_original>
// kernel: stacked_lstm_forward_padded.1
$region0: #{stacked_lstm_forward_padded.1}
  #allocation0 [shape = 'u32[]', space=smem, size = 0x4, offset = 0x4, fixed_abs, tag = 'smem constant byte address 0x4 - core index']
  #allocation1 [shape = 'u32[144,128]{1,0:T(1,128)}', space=vmem, size = 0x12000, scoped, tag = 'internal scratch']
  #allocation2 [shape = 'f32[8,256]{1,0:T(8,128)}', space=vmem, size = 0x2000, scoped, tag = 'scratch operand']
  %s0 = inlined_call_operand.vmem [shape: f32[8,128], index: 0, kind: input, shape index: {}]
  %s1 = inlined_call_operand.vmem [shape: f32[2,8,128], index: 1, kind: input, shape index: {}, may-alias: {1,5}]
  %s2 = inlined_call_operand.vmem [shape: f32[2,8,128], index: 2, kind: input, shape index: {}, may-alias: {2,6}]
  %s3 = inlined_call_operand.hbm [shape: bf16[2,256,512], index: 3, kind: input, shape index: {}]
  %s4 = inlined_call_operand.vmem [shape: f32[2,1,512], index: 4, kind: input, shape index: {}]
  %s5 = inlined_call_operand.vmem [shape: f32[2,8,128], index: 5, kind: output, shape index: {0}, may-alias: {1,5}]
  %s6 = inlined_call_operand.vmem [shape: f32[2,8,128], index: 6, kind: output, shape index: {1}, may-alias: {2,6}]
  %7 = xla_tuple %s5, %s6
  %s8 = sld [smem:[#allocation0]]
  $region73: #{stacked_lstm_forward_padded.1} parent=0
    _
  %s10 = ssub.s32 1, %s8
  %s11 = scalar_select 0, %s10, %s8
  $region1: #{stacked_lstm_forward_padded.1} parent=0
    #allocation3 [shape = 'u8[524288]{0}', space=vmem, size = 0x80000, scoped, tag = 'input window, operand 3']
    #allocation4 [shape = 's32[2]{0}', space=sflag, size = 0x8, scoped, tag = 'scoped memory for stacked_lstm_forward_padded.1']
    %12 = vsyncpa [#allocation4], 0
    %s13 = scalar_lea.sflag [#allocation4], 1
    %14 = vsyncpa %s13, 0
    loop: start=0, step=1, limit=4
    $region2: #{stacked_lstm_forward_padded.1} parent=1 // loop_pre_header
      _
    $region3: #{stacked_lstm_forward_padded.1} parent=1 // loop_header
      %s16 = sphi 0, %s20
      %p17 = scmp.ge.s32.totalorder %s16, 4
      %s24 = sphi 0, %s24
      %s26 = sphi 0, %s24
      %s27 = sphi 0, %s26
      %s41 = sphi 0, %s27
      %s47 = sphi 0, %s49
      %s50 = sphi 0, %s47
      %s51 = sphi 0, %s50
      %s67 = sphi 0, %s51
      %s73 = sphi 0, %s75
      %s76 = sphi 0, %s73
      %s77 = sphi 0, %s76
      %s93 = sphi 0, %s77
      %s99 = sphi 0, %s101
      %s102 = sphi 0, %s99
      %s103 = sphi 0, %s102
      %s119 = sphi 0, %s103
      %s123 = sphi 0, %s123
      %s125 = sphi 0, %s123
      %s126 = sphi 0, %s125
      %s140 = sphi 0, %s126
      %s146 = sphi 0, %s148
      %s149 = sphi 0, %s146
      %s150 = sphi 0, %s149
      %s166 = sphi 0, %s150
      %s172 = sphi 0, %s174
      %s175 = sphi 0, %s172
      %s176 = sphi 0, %s175
      %s192 = sphi 0, %s176
    $region4: #{stacked_lstm_forward_padded.1} parent=1 // loop_header_branch
      %19 = sbr.rel (%p17) target = $region8
    $region5: #{stacked_lstm_forward_padded.1} parent=1 // loop_body
      %s21 = ssub.s32 %s16, 1
      %s22 = ssub.s32 %s16, 2
      %s23 = sadd.s32 %s16, 1
      %s25 = sadd.s32 %s24, 1
      %p28 = scmp.eq.s32.totalorder %s16, 1
      %p29 = scmp.ne.s32.totalorder %s24, %s26
      %p30 = scmp.eq.s32.totalorder %s16, 0
      %p31 = por %p29, %p30
      %p32 = scmp.ne.s32.totalorder %s24, %s26
      %p33 = scmp.eq.s32.totalorder %s21, 1
      %p34 = por %p32, %p33
      %p35 = scmp.ne.s32.totalorder %s26, %s27
      %p36 = scmp.eq.s32.totalorder %s21, 0
      %p37 = por %p35, %p36
      %p38 = scmp.ne.s32.totalorder %s26, %s27
      %p39 = scmp.eq.s32.totalorder %s22, 1
      %p40 = por %p38, %p39
      %p42 = scmp.ne.s32.totalorder %s27, %s41
      %p43 = scmp.eq.s32.totalorder %s22, 0
      %p44 = por %p42, %p43
      %s45 = ssub.s32 %s16, %s23
      %p46 = scmp.eq.s32.totalorder %s45, 0
      %s48 = sadd.s32 %s47, 1
      %s49 = scalar_select %p46, %s47, %s48
      %p52 = pneg %p46
      %p53 = scmp.eq.s32.totalorder %s16, 1
      %p54 = por %p52, %p53
      %p55 = scmp.ne.s32.totalorder %s47, %s50
      %p56 = scmp.eq.s32.totalorder %s16, 0
      %p57 = por %p55, %p56
      %p58 = scmp.ne.s32.totalorder %s47, %s50
      %p59 = scmp.eq.s32.totalorder %s21, 1
      %p60 = por %p58, %p59
      %p61 = scmp.ne.s32.totalorder %s50, %s51
      %p62 = scmp.eq.s32.totalorder %s21, 0
      %p63 = por %p61, %p62
      %p64 = scmp.ne.s32.totalorder %s50, %s51
      %p65 = scmp.eq.s32.totalorder %s22, 1
      %p66 = por %p64, %p65
      %p68 = scmp.ne.s32.totalorder %s51, %s67
      %p69 = scmp.eq.s32.totalorder %s22, 0
      %p70 = por %p68, %p69
      %s71 = ssub.s32 %s16, %s23
      %p72 = scmp.eq.s32.totalorder %s71, 0
      %s74 = sadd.s32 %s73, 1
      %s75 = scalar_select %p72, %s73, %s74
      %p78 = pneg %p72
      %p79 = scmp.eq.s32.totalorder %s16, 1
      %p80 = por %p78, %p79
      %p81 = scmp.ne.s32.totalorder %s73, %s76
      %p82 = scmp.eq.s32.totalorder %s16, 0
      %p83 = por %p81, %p82
      %p84 = scmp.ne.s32.totalorder %s73, %s76
      %p85 = scmp.eq.s32.totalorder %s21, 1
      %p86 = por %p84, %p85
      %p87 = scmp.ne.s32.totalorder %s76, %s77
      %p88 = scmp.eq.s32.totalorder %s21, 0
      %p89 = por %p87, %p88
      %p90 = scmp.ne.s32.totalorder %s76, %s77
      %p91 = scmp.eq.s32.totalorder %s22, 1
      %p92 = por %p90, %p91
      %p94 = scmp.ne.s32.totalorder %s77, %s93
      %p95 = scmp.eq.s32.totalorder %s22, 0
      %p96 = por %p94, %p95
      %s97 = ssub.s32 %s16, %s23
      %p98 = scmp.eq.s32.totalorder %s97, 0
      %s100 = sadd.s32 %s99, 1
      %s101 = scalar_select %p98, %s99, %s100
      %p104 = pneg %p98
      %p105 = scmp.eq.s32.totalorder %s16, 1
      %p106 = por %p104, %p105
      %p107 = scmp.ne.s32.totalorder %s99, %s102
      %p108 = scmp.eq.s32.totalorder %s16, 0
      %p109 = por %p107, %p108
      %p110 = scmp.ne.s32.totalorder %s99, %s102
      %p111 = scmp.eq.s32.totalorder %s21, 1
      %p112 = por %p110, %p111
      %p113 = scmp.ne.s32.totalorder %s102, %s103
      %p114 = scmp.eq.s32.totalorder %s21, 0
      %p115 = por %p113, %p114
      %p116 = scmp.ne.s32.totalorder %s102, %s103
      %p117 = scmp.eq.s32.totalorder %s22, 1
      %p118 = por %p116, %p117
      %p120 = scmp.ne.s32.totalorder %s103, %s119
      %p121 = scmp.eq.s32.totalorder %s22, 0
      %p122 = por %p120, %p121
      %s124 = sadd.s32 %s123, 1
      %p127 = scmp.eq.s32.totalorder %s16, 1
      %p128 = scmp.ne.s32.totalorder %s123, %s125
      %p129 = scmp.eq.s32.totalorder %s16, 0
      %p130 = por %p128, %p129
      %p131 = scmp.ne.s32.totalorder %s123, %s125
      %p132 = scmp.eq.s32.totalorder %s21, 1
      %p133 = por %p131, %p132
      %p134 = scmp.ne.s32.totalorder %s125, %s126
      %p135 = scmp.eq.s32.totalorder %s21, 0
      %p136 = por %p134, %p135
      %p137 = scmp.ne.s32.totalorder %s125, %s126
      %p138 = scmp.eq.s32.totalorder %s22, 1
      %p139 = por %p137, %p138
      %p141 = scmp.ne.s32.totalorder %s126, %s140
      %p142 = scmp.eq.s32.totalorder %s22, 0
      %p143 = por %p141, %p142
      %s144 = ssub.s32 %s16, %s23
      %p145 = scmp.eq.s32.totalorder %s144, 0
      %s147 = sadd.s32 %s146, 1
      %s148 = scalar_select %p145, %s146, %s147
      %p151 = pneg %p145
      %p152 = scmp.eq.s32.totalorder %s16, 1
      %p153 = por %p151, %p152
      %p154 = scmp.ne.s32.totalorder %s146, %s149
      %p155 = scmp.eq.s32.totalorder %s16, 0
      %p156 = por %p154, %p155
      %p157 = scmp.ne.s32.totalorder %s146, %s149
      %p158 = scmp.eq.s32.totalorder %s21, 1
      %p159 = por %p157, %p158
      %p160 = scmp.ne.s32.totalorder %s149, %s150
      %p161 = scmp.eq.s32.totalorder %s21, 0
      %p162 = por %p160, %p161
      %p163 = scmp.ne.s32.totalorder %s149, %s150
      %p164 = scmp.eq.s32.totalorder %s22, 1
      %p165 = por %p163, %p164
      %p167 = scmp.ne.s32.totalorder %s150, %s166
      %p168 = scmp.eq.s32.totalorder %s22, 0
      %p169 = por %p167, %p168
      %s170 = ssub.s32 %s16, %s23
      %p171 = scmp.eq.s32.totalorder %s170, 0
      %s173 = sadd.s32 %s172, 1
      %s174 = scalar_select %p171, %s172, %s173
      %p177 = pneg %p171
      %p178 = scmp.eq.s32.totalorder %s16, 1
      %p179 = por %p177, %p178
      %p180 = scmp.ne.s32.totalorder %s172, %s175
      %p181 = scmp.eq.s32.totalorder %s16, 0
      %p182 = por %p180, %p181
      %p183 = scmp.ne.s32.totalorder %s172, %s175
      %p184 = scmp.eq.s32.totalorder %s21, 1
      %p185 = por %p183, %p184
      %p186 = scmp.ne.s32.totalorder %s175, %s176
      %p187 = scmp.eq.s32.totalorder %s21, 0
      %p188 = por %p186, %p187
      %p189 = scmp.ne.s32.totalorder %s175, %s176
      %p190 = scmp.eq.s32.totalorder %s22, 1
      %p191 = por %p189, %p190
      %p193 = scmp.ne.s32.totalorder %s176, %s192
      %p194 = scmp.eq.s32.totalorder %s22, 0
      %p195 = por %p193, %p194
      %p196 = scmp.le.s32.totalorder 1, %s16
      %p197 = scmp.lt.s32.totalorder %s16, 3
      %p198 = pnand %p196, %p197
      %p199 = pneg %p198
      // Predicated region
      $region9: #{stacked_lstm_forward_padded.1} parent=5 // pred_check
        _
      $region10: #{stacked_lstm_forward_padded.1} parent=5 // pred_check_branch
        %201 = sbr.rel (%p198) target = $region12
      $region11: #{stacked_lstm_forward_padded.1} parent=5 // pred_region
        %s202 = ssub.s32 %s16, 1
        // Predicated region
        $region13: #{stacked_lstm_forward_padded.1} parent=11 // pred_check
          %p203 = pneg %p37
        $region14: #{stacked_lstm_forward_padded.1} parent=11 // pred_check_branch
          %205 = sbr.rel (%p203) target = $region16
        $region15: #{stacked_lstm_forward_padded.1} parent=11 // pred_region
          _
        $region16: #{stacked_lstm_forward_padded.1} parent=11 // pred_fallthru
          _
        // Predicated region
        $region17: #{stacked_lstm_forward_padded.1} parent=11 // pred_check
          %p206 = pneg %p136
        $region18: #{stacked_lstm_forward_padded.1} parent=11 // pred_check_branch
          %208 = sbr.rel (%p206) target = $region20
        $region19: #{stacked_lstm_forward_padded.1} parent=11 // pred_region
          _
        $region20: #{stacked_lstm_forward_padded.1} parent=11 // pred_fallthru
          _
      $region12: #{stacked_lstm_forward_padded.1} parent=5 // pred_fallthru
        _
      %p209 = scmp.lt.s32.totalorder %s16, 2
      // Predicated region
      $region21: #{stacked_lstm_forward_padded.1} parent=5 // pred_check
        %p210 = pneg %p209
      $region22: #{stacked_lstm_forward_padded.1} parent=5 // pred_check_branch
        %212 = sbr.rel (%p210) target = $region24
      $region23: #{stacked_lstm_forward_padded.1} parent=5 // pred_region
        // Predicated region
        $region25: #{stacked_lstm_forward_padded.1} parent=23 // pred_check
          %p213 = pneg %p57
        $region26: #{stacked_lstm_forward_padded.1} parent=23 // pred_check_branch
          %215 = sbr.rel (%p213) target = $region28
        $region27: #{stacked_lstm_forward_padded.1} parent=23 // pred_region
          %p216 = scmp.lt.s32.totalorder %s16, 1
          %s217 = scalar_select %p216, %s16, 1
          %s218 = smul.addr %s217, 8
          %s219 = scalar_lea.vmem %s1, %s218
        $region28: #{stacked_lstm_forward_padded.1} parent=23 // pred_fallthru
          _
        // Predicated region
        $region29: #{stacked_lstm_forward_padded.1} parent=23 // pred_check
          %p220 = pneg %p83
        $region30: #{stacked_lstm_forward_padded.1} parent=23 // pred_check_branch
          %222 = sbr.rel (%p220) target = $region32
        $region31: #{stacked_lstm_forward_padded.1} parent=23 // pred_region
          %p223 = scmp.lt.s32.totalorder %s16, 1
          %s224 = scalar_select %p223, %s16, 1
          %s225 = smul.addr %s224, 8
          %s226 = scalar_lea.vmem %s2, %s225
        $region32: #{stacked_lstm_forward_padded.1} parent=23 // pred_fallthru
          _
        // Predicated region
        $region33: #{stacked_lstm_forward_padded.1} parent=23 // pred_check
          %p227 = pneg %p109
        $region34: #{stacked_lstm_forward_padded.1} parent=23 // pred_check_branch
          %229 = sbr.rel (%p227) target = $region36
        $region35: #{stacked_lstm_forward_padded.1} parent=23 // pred_region
          %s230 = sand.u32 %s99, 1
          %s231 = scalar_lea.sflag [#allocation4], %s230
          %s232 = sand.u32 %s99, 1
          %s233 = smul.addr %s232, 512
          %s234 = scalar_lea.vmem [#allocation3], %s233
          %s236 = ssub.s32 8192, 8192
          %237 = vsyncadd %s231, %s236
          %s238 = smul.addr %s16, 128
          %s239 = smul.addr %s238, 64
          %s240 = scalar_lea.hbm %s3, %s239
          %s241 = sshll.u32 %s234, 4
          %s242 = int_to_ptr.vmem [resolvable:$true] %s241
          %247 = dma.hbm_to_vmem [thread:$0]  %s240, 8192, %s242, %s231, 256, 256, 16
        $region36: #{stacked_lstm_forward_padded.1} parent=23 // pred_fallthru
          _
      $region24: #{stacked_lstm_forward_padded.1} parent=5 // pred_fallthru
        _
      %p248 = scmp.le.s32.totalorder 1, %s16
      %p249 = scmp.lt.s32.totalorder %s16, 3
      %p250 = pnand %p248, %p249
      %p251 = pneg %p250
      // Predicated region
      $region37: #{stacked_lstm_forward_padded.1} parent=5 // pred_check
        _
      $region38: #{stacked_lstm_forward_padded.1} parent=5 // pred_check_branch
        %253 = sbr.rel (%p250) target = $region40
      $region39: #{stacked_lstm_forward_padded.1} parent=5 // pred_region
        %s254 = ssub.s32 %s16, 1
        %s255 = sand.u32 %s102, 1
        %s256 = scalar_lea.sflag [#allocation4], %s255
        %s257 = sand.u32 %s102, 1
        %s258 = smul.addr %s257, 512
        %s259 = scalar_lea.vmem [#allocation3], %s258
        // Predicated region
        $region41: #{stacked_lstm_forward_padded.1} parent=39 // pred_check
          %p260 = pneg %p115
        $region42: #{stacked_lstm_forward_padded.1} parent=39 // pred_check_branch
          %262 = sbr.rel (%p260) target = $region44
        $region43: #{stacked_lstm_forward_padded.1} parent=39 // pred_region
          %263 = dma.done %s256, 8192
        $region44: #{stacked_lstm_forward_padded.1} parent=39 // pred_fallthru
          _
        %p264 = pneg %p37
        %p265 = pneg %p34
        %p266 = scmp.lt.s32.totalorder %s21, 1
        %s267 = scalar_select %p266, %s21, 1
        %s268 = smul.addr %s267, 8
        %s269 = scalar_lea.vmem %s1, %s268
        %p270 = pneg %p63
        %p271 = pneg %p60
        %p272 = scmp.lt.s32.totalorder %s21, 1
        %s273 = scalar_select %p272, %s21, 1
        %s274 = smul.addr %s273, 8
        %s275 = scalar_lea.vmem %s2, %s274
        %p276 = pneg %p89
        %p277 = pneg %p86
        %s278 = sand.u32 %s102, 1
        %s279 = scalar_lea.sflag [#allocation4], %s278
        %s280 = sand.u32 %s102, 1
        %s281 = smul.addr %s280, 512
        %s282 = scalar_lea.vmem [#allocation3], %s281
        %p283 = pneg %p115
        %p284 = pneg %p112
        %p285 = pneg %p136
        %p286 = pneg %p133
        %p287 = pneg %p162
        %p288 = pneg %p159
        %p289 = scmp.lt.s32.totalorder %s21, 1
        %s290 = scalar_select %p289, %s21, 1
        %s291 = smul.addr %s290, 8
        %s292 = scalar_lea.vmem %s5, %s291
        %p293 = pneg %p188
        %p294 = pneg %p185
        %p295 = scmp.lt.s32.totalorder %s21, 1
        %s296 = scalar_select %p295, %s21, 1
        %s297 = smul.addr %s296, 8
        %s298 = scalar_lea.vmem %s6, %s297
        %p299 = scmp.lt.s32.totalorder %s21, 1
        %s300 = scalar_select %p299, %s21, 1
        %s301 = smul.addr %s300, 8
        %s302 = scalar_lea.vmem %s1, %s301
        %p303 = scmp.lt.s32.totalorder %s21, 1
        %s304 = scalar_select %p303, %s21, 1
        %s305 = smul.addr %s304, 8
        %s306 = scalar_lea.vmem %s2, %s305
        %p307 = scmp.lt.s32.totalorder %s21, 1
        %s308 = scalar_select %p307, %s21, 1
        %s309 = smul.addr %s308, 8
        %s310 = scalar_lea.vmem %s5, %s309
        %p311 = scmp.lt.s32.totalorder %s21, 1
        %s312 = scalar_select %p311, %s21, 1
        %s313 = smul.addr %s312, 8
        %s314 = scalar_lea.vmem %s6, %s313
        %p315 = scmp.eq.s32.totalorder %s21, 0
        // Predicated region
        $region45: #{stacked_lstm_forward_padded.1} parent=39 // pred_check
          %p316 = pneg %p315
        $region46: #{stacked_lstm_forward_padded.1} parent=39 // pred_check_branch
          %318 = sbr.rel (%p316) target = $region48
        $region47: #{stacked_lstm_forward_padded.1} parent=39 // pred_region
          %v319 = vld [vmem:[%s0] sm:$0xff]
          %320 = vst [vmem:[#allocation2] sm:$0xff] %v319
        $region48: #{stacked_lstm_forward_padded.1} parent=39 // pred_fallthru
          _
        %v321 = vld [vmem:[%s302] sm:$0xff]
        %322 = vst [vmem:[#allocation2 + $0x8] sm:$0xff] %v321
        %v323 = vld [vmem:[%s306] sm:$0xff]
        %v324 = vld [vmem:[#allocation2] sm:$0xff]
        %v325 = vld [vmem:[#allocation2 + $0x8] sm:$0xff]
        %v326 = vpack.c.bf16 %v324, %v324
        %v327 = vpack.c.bf16 %v325, %v325
        %v328 = vld [vmem:[%s259] sm:$0xff]
        %v329 = vld [vmem:[%s259 + $0x8] sm:$0xff]
        %v330 = vld [vmem:[%s259 + $0x10] sm:$0xff]
        %v331 = vld [vmem:[%s259 + $0x18] sm:$0xff]
        %v332 = vld [vmem:[%s259 + $0x20] sm:$0xff]
        %v333 = vld [vmem:[%s259 + $0x28] sm:$0xff]
        %v334 = vld [vmem:[%s259 + $0x30] sm:$0xff]
        %v335 = vld [vmem:[%s259 + $0x38] sm:$0xff]
        %v336 = vld [vmem:[%s259 + $0x40] sm:$0xff]
        %v337 = vld [vmem:[%s259 + $0x48] sm:$0xff]
        %v338 = vld [vmem:[%s259 + $0x50] sm:$0xff]
        %v339 = vld [vmem:[%s259 + $0x58] sm:$0xff]
        %v340 = vld [vmem:[%s259 + $0x60] sm:$0xff]
        %v341 = vld [vmem:[%s259 + $0x68] sm:$0xff]
        %v342 = vld [vmem:[%s259 + $0x70] sm:$0xff]
        %v343 = vld [vmem:[%s259 + $0x78] sm:$0xff]
        %v344 = vld [vmem:[%s259 + $0x80] sm:$0xff]
        %v345 = vld [vmem:[%s259 + $0x88] sm:$0xff]
        %v346 = vld [vmem:[%s259 + $0x90] sm:$0xff]
        %v347 = vld [vmem:[%s259 + $0x98] sm:$0xff]
        %v348 = vld [vmem:[%s259 + $0xa0] sm:$0xff]
        %v349 = vld [vmem:[%s259 + $0xa8] sm:$0xff]
        %v350 = vld [vmem:[%s259 + $0xb0] sm:$0xff]
        %v351 = vld [vmem:[%s259 + $0xb8] sm:$0xff]
        %v352 = vld [vmem:[%s259 + $0xc0] sm:$0xff]
        %v353 = vld [vmem:[%s259 + $0xc8] sm:$0xff]
        %v354 = vld [vmem:[%s259 + $0xd0] sm:$0xff]
        %v355 = vld [vmem:[%s259 + $0xd8] sm:$0xff]
        %v356 = vld [vmem:[%s259 + $0xe0] sm:$0xff]
        %v357 = vld [vmem:[%s259 + $0xe8] sm:$0xff]
        %v358 = vld [vmem:[%s259 + $0xf0] sm:$0xff]
        %v359 = vld [vmem:[%s259 + $0xf8] sm:$0xff]
        %v360 = vld [vmem:[%s259 + $0x100] sm:$0xff]
        %v361 = vld [vmem:[%s259 + $0x108] sm:$0xff]
        %v362 = vld [vmem:[%s259 + $0x110] sm:$0xff]
        %v363 = vld [vmem:[%s259 + $0x118] sm:$0xff]
        %v364 = vld [vmem:[%s259 + $0x120] sm:$0xff]
        %v365 = vld [vmem:[%s259 + $0x128] sm:$0xff]
        %v366 = vld [vmem:[%s259 + $0x130] sm:$0xff]
        %v367 = vld [vmem:[%s259 + $0x138] sm:$0xff]
        %v368 = vld [vmem:[%s259 + $0x140] sm:$0xff]
        %v369 = vld [vmem:[%s259 + $0x148] sm:$0xff]
        %v370 = vld [vmem:[%s259 + $0x150] sm:$0xff]
        %v371 = vld [vmem:[%s259 + $0x158] sm:$0xff]
        %v372 = vld [vmem:[%s259 + $0x160] sm:$0xff]
        %v373 = vld [vmem:[%s259 + $0x168] sm:$0xff]
        %v374 = vld [vmem:[%s259 + $0x170] sm:$0xff]
        %v375 = vld [vmem:[%s259 + $0x178] sm:$0xff]
        %v376 = vld [vmem:[%s259 + $0x180] sm:$0xff]
        %v377 = vld [vmem:[%s259 + $0x188] sm:$0xff]
        %v378 = vld [vmem:[%s259 + $0x190] sm:$0xff]
        %v379 = vld [vmem:[%s259 + $0x198] sm:$0xff]
        %v380 = vld [vmem:[%s259 + $0x1a0] sm:$0xff]
        %v381 = vld [vmem:[%s259 + $0x1a8] sm:$0xff]
        %v382 = vld [vmem:[%s259 + $0x1b0] sm:$0xff]
        %v383 = vld [vmem:[%s259 + $0x1b8] sm:$0xff]
        %v384 = vld [vmem:[%s259 + $0x1c0] sm:$0xff]
        %v385 = vld [vmem:[%s259 + $0x1c8] sm:$0xff]
        %v386 = vld [vmem:[%s259 + $0x1d0] sm:$0xff]
        %v387 = vld [vmem:[%s259 + $0x1d8] sm:$0xff]
        %v388 = vld [vmem:[%s259 + $0x1e0] sm:$0xff]
        %v389 = vld [vmem:[%s259 + $0x1e8] sm:$0xff]
        %v390 = vld [vmem:[%s259 + $0x1f0] sm:$0xff]
        %v391 = vld [vmem:[%s259 + $0x1f8] sm:$0xff]
        %s392 = smul.u32 %s21, 4
        %s393 = scalar_lea.vmem %s4, %s392
        %v394 = vld [vmem:[%s393] sm:$0xf]
        %v396 = vlaneseq
        %v397 = vshrl.u32 %v396, 7
        %v398 = vsub.s32 0, %v397
        %v399 = vrot.slane %v394, %v398
        %v400 = vlaneseq
        %v401 = vshrl.u32 %v400, 7
        %v402 = vsub.s32 1, %v401
        %v403 = vrot.slane %v394, %v402
        %v404 = vlaneseq
        %v405 = vshrl.u32 %v404, 7
        %v406 = vsub.s32 2, %v405
        %v407 = vrot.slane %v394, %v406
        %v408 = vlaneseq
        %v409 = vshrl.u32 %v408, 7
        %v410 = vsub.s32 3, %v409
        %v411 = vrot.slane %v394, %v410
        %v480 = vunpack.c.l.b16 %v328
        %v481 = vunpack.c.h.b16 %v328
        %v482 = vunpack.c.l.b16 %v329
        %v483 = vunpack.c.h.b16 %v329
        %v484 = vunpack.c.l.b16 %v330
        %v485 = vunpack.c.h.b16 %v330
        %v486 = vunpack.c.l.b16 %v331
        %v487 = vunpack.c.h.b16 %v331
        %v488 = vunpack.c.l.b16 %v332
        %v489 = vunpack.c.h.b16 %v332
        %v490 = vunpack.c.l.b16 %v333
        %v491 = vunpack.c.h.b16 %v333
        %v492 = vunpack.c.l.b16 %v334
        %v493 = vunpack.c.h.b16 %v334
        %v494 = vunpack.c.l.b16 %v335
        %v495 = vunpack.c.h.b16 %v335
        %v496 = vunpack.c.l.b16 %v336
        %v497 = vunpack.c.h.b16 %v336
        %v498 = vunpack.c.l.b16 %v337
        %v499 = vunpack.c.h.b16 %v337
        %v500 = vunpack.c.l.b16 %v338
        %v501 = vunpack.c.h.b16 %v338
        %v502 = vunpack.c.l.b16 %v339
        %v503 = vunpack.c.h.b16 %v339
        %v504 = vunpack.c.l.b16 %v340
        %v505 = vunpack.c.h.b16 %v340
        %v506 = vunpack.c.l.b16 %v341
        %v507 = vunpack.c.h.b16 %v341
        %v508 = vunpack.c.l.b16 %v342
        %v509 = vunpack.c.h.b16 %v342
        %v510 = vunpack.c.l.b16 %v343
        %v511 = vunpack.c.h.b16 %v343
        %v512 = vunpack.c.l.b16 %v344
        %v513 = vunpack.c.h.b16 %v344
        %v514 = vunpack.c.l.b16 %v345
        %v515 = vunpack.c.h.b16 %v345
        %v516 = vunpack.c.l.b16 %v346
        %v517 = vunpack.c.h.b16 %v346
        %v518 = vunpack.c.l.b16 %v347
        %v519 = vunpack.c.h.b16 %v347
        %v520 = vunpack.c.l.b16 %v348
        %v521 = vunpack.c.h.b16 %v348
        %v522 = vunpack.c.l.b16 %v349
        %v523 = vunpack.c.h.b16 %v349
        %v524 = vunpack.c.l.b16 %v350
        %v525 = vunpack.c.h.b16 %v350
        %v526 = vunpack.c.l.b16 %v351
        %v527 = vunpack.c.h.b16 %v351
        %v528 = vunpack.c.l.b16 %v352
        %v529 = vunpack.c.h.b16 %v352
        %v530 = vunpack.c.l.b16 %v353
        %v531 = vunpack.c.h.b16 %v353
        %v532 = vunpack.c.l.b16 %v354
        %v533 = vunpack.c.h.b16 %v354
        %v534 = vunpack.c.l.b16 %v355
        %v535 = vunpack.c.h.b16 %v355
        %v536 = vunpack.c.l.b16 %v356
        %v537 = vunpack.c.h.b16 %v356
        %v538 = vunpack.c.l.b16 %v357
        %v539 = vunpack.c.h.b16 %v357
        %v540 = vunpack.c.l.b16 %v358
        %v541 = vunpack.c.h.b16 %v358
        %v542 = vunpack.c.l.b16 %v359
        %v543 = vunpack.c.h.b16 %v359
        %v544 = vunpack.c.l.b16 %v360
        %v545 = vunpack.c.h.b16 %v360
        %v546 = vunpack.c.l.b16 %v361
        %v547 = vunpack.c.h.b16 %v361
        %v548 = vunpack.c.l.b16 %v362
        %v549 = vunpack.c.h.b16 %v362
        %v550 = vunpack.c.l.b16 %v363
        %v551 = vunpack.c.h.b16 %v363
        %v552 = vunpack.c.l.b16 %v364
        %v553 = vunpack.c.h.b16 %v364
        %v554 = vunpack.c.l.b16 %v365
        %v555 = vunpack.c.h.b16 %v365
        %v556 = vunpack.c.l.b16 %v366
        %v557 = vunpack.c.h.b16 %v366
        %v558 = vunpack.c.l.b16 %v367
        %v559 = vunpack.c.h.b16 %v367
        %v560 = vunpack.c.l.b16 %v368
        %v561 = vunpack.c.h.b16 %v368
        %v562 = vunpack.c.l.b16 %v369
        %v563 = vunpack.c.h.b16 %v369
        %v564 = vunpack.c.l.b16 %v370
        %v565 = vunpack.c.h.b16 %v370
        %v566 = vunpack.c.l.b16 %v371
        %v567 = vunpack.c.h.b16 %v371
        %v568 = vunpack.c.l.b16 %v372
        %v569 = vunpack.c.h.b16 %v372
        %v570 = vunpack.c.l.b16 %v373
        %v571 = vunpack.c.h.b16 %v373
        %v572 = vunpack.c.l.b16 %v374
        %v573 = vunpack.c.h.b16 %v374
        %v574 = vunpack.c.l.b16 %v375
        %v575 = vunpack.c.h.b16 %v375
        %v576 = vunpack.c.l.b16 %v376
        %v577 = vunpack.c.h.b16 %v376
        %v578 = vunpack.c.l.b16 %v377
        %v579 = vunpack.c.h.b16 %v377
        %v580 = vunpack.c.l.b16 %v378
        %v581 = vunpack.c.h.b16 %v378
        %v582 = vunpack.c.l.b16 %v379
        %v583 = vunpack.c.h.b16 %v379
        %v584 = vunpack.c.l.b16 %v380
        %v585 = vunpack.c.h.b16 %v380
        %v586 = vunpack.c.l.b16 %v381
        %v587 = vunpack.c.h.b16 %v381
        %v588 = vunpack.c.l.b16 %v382
        %v589 = vunpack.c.h.b16 %v382
        %v590 = vunpack.c.l.b16 %v383
        %v591 = vunpack.c.h.b16 %v383
        %v592 = vunpack.c.l.b16 %v384
        %v593 = vunpack.c.h.b16 %v384
        %v594 = vunpack.c.l.b16 %v385
        %v595 = vunpack.c.h.b16 %v385
        %v596 = vunpack.c.l.b16 %v386
        %v597 = vunpack.c.h.b16 %v386
        %v598 = vunpack.c.l.b16 %v387
        %v599 = vunpack.c.h.b16 %v387
        %v600 = vunpack.c.l.b16 %v388
        %v601 = vunpack.c.h.b16 %v388
        %v602 = vunpack.c.l.b16 %v389
        %v603 = vunpack.c.h.b16 %v389
        %v604 = vunpack.c.l.b16 %v390
        %v605 = vunpack.c.h.b16 %v390
        %v606 = vunpack.c.l.b16 %v391
        %v607 = vunpack.c.h.b16 %v391
        %v608 = vpack.c.b16 %v484, %v480
        %v609 = vpack.c.b16 %v485, %v481
        %v610 = vpack.c.b16 %v486, %v482
        %v611 = vpack.c.b16 %v487, %v483
        %v612 = vpack.c.b16 %v492, %v488
        %v613 = vpack.c.b16 %v493, %v489
        %v614 = vpack.c.b16 %v494, %v490
        %v615 = vpack.c.b16 %v495, %v491
        %v616 = vpack.c.b16 %v500, %v496
        %v617 = vpack.c.b16 %v501, %v497
        %v618 = vpack.c.b16 %v502, %v498
        %v619 = vpack.c.b16 %v503, %v499
        %v620 = vpack.c.b16 %v508, %v504
        %v621 = vpack.c.b16 %v509, %v505
        %v622 = vpack.c.b16 %v510, %v506
        %v623 = vpack.c.b16 %v511, %v507
        %v624 = vpack.c.b16 %v516, %v512
        %v625 = vpack.c.b16 %v517, %v513
        %v626 = vpack.c.b16 %v518, %v514
        %v627 = vpack.c.b16 %v519, %v515
        %v628 = vpack.c.b16 %v524, %v520
        %v629 = vpack.c.b16 %v525, %v521
        %v630 = vpack.c.b16 %v526, %v522
        %v631 = vpack.c.b16 %v527, %v523
        %v632 = vpack.c.b16 %v532, %v528
        %v633 = vpack.c.b16 %v533, %v529
        %v634 = vpack.c.b16 %v534, %v530
        %v635 = vpack.c.b16 %v535, %v531
        %v636 = vpack.c.b16 %v540, %v536
        %v637 = vpack.c.b16 %v541, %v537
        %v638 = vpack.c.b16 %v542, %v538
        %v639 = vpack.c.b16 %v543, %v539
        %v640 = vpack.c.b16 %v548, %v544
        %v641 = vpack.c.b16 %v549, %v545
        %v642 = vpack.c.b16 %v550, %v546
        %v643 = vpack.c.b16 %v551, %v547
        %v644 = vpack.c.b16 %v556, %v552
        %v645 = vpack.c.b16 %v557, %v553
        %v646 = vpack.c.b16 %v558, %v554
        %v647 = vpack.c.b16 %v559, %v555
        %v648 = vpack.c.b16 %v564, %v560
        %v649 = vpack.c.b16 %v565, %v561
        %v650 = vpack.c.b16 %v566, %v562
        %v651 = vpack.c.b16 %v567, %v563
        %v652 = vpack.c.b16 %v572, %v568
        %v653 = vpack.c.b16 %v573, %v569
        %v654 = vpack.c.b16 %v574, %v570
        %v655 = vpack.c.b16 %v575, %v571
        %v656 = vpack.c.b16 %v580, %v576
        %v657 = vpack.c.b16 %v581, %v577
        %v658 = vpack.c.b16 %v582, %v578
        %v659 = vpack.c.b16 %v583, %v579
        %v660 = vpack.c.b16 %v588, %v584
        %v661 = vpack.c.b16 %v589, %v585
        %v662 = vpack.c.b16 %v590, %v586
        %v663 = vpack.c.b16 %v591, %v587
        %v664 = vpack.c.b16 %v596, %v592
        %v665 = vpack.c.b16 %v597, %v593
        %v666 = vpack.c.b16 %v598, %v594
        %v667 = vpack.c.b16 %v599, %v595
        %v668 = vpack.c.b16 %v604, %v600
        %v669 = vpack.c.b16 %v605, %v601
        %v670 = vpack.c.b16 %v606, %v602
        %v671 = vpack.c.b16 %v607, %v603
        %736 = vmatprep.subr.bf16.mxu0 %v637
        %737 = vmatpush1.bf16.msra.mxu0 %v636
        %738 = vmatprep.subr.bf16.mxu0 %v633
        %739 = vmatpush1.bf16.msra.mxu0 %v632
        %740 = vmatprep.subr.bf16.mxu0 %v629
        %741 = vmatpush1.bf16.msra.mxu0 %v628
        %742 = vmatprep.subr.bf16.mxu0 %v625
        %743 = vmatpush1.bf16.msra.mxu0 %v624
        %744 = vmatprep.subr.bf16.mxu0 %v621
        %745 = vmatpush1.bf16.msra.mxu0 %v620
        %746 = vmatprep.subr.bf16.mxu0 %v617
        %747 = vmatpush1.bf16.msra.mxu0 %v616
        %748 = vmatprep.subr.bf16.mxu0 %v613
        %749 = vmatpush1.bf16.msra.mxu0 %v612
        %750 = vmatprep.subr.bf16.mxu0 %v609
        %751 = vmatpush1.bf16.msra.mxu0 %v608
        %752 = vmatprep.subr.bf16.mxu0 %v669
        %753 = vmatpush2.bf16.msra.mxu0 %v668
        %754 = vmatprep.subr.bf16.mxu0 %v665
        %755 = vmatpush2.bf16.msra.mxu0 %v664
        %756 = vmatprep.subr.bf16.mxu0 %v661
        %757 = vmatpush2.bf16.msra.mxu0 %v660
        %758 = vmatprep.subr.bf16.mxu0 %v657
        %759 = vmatpush2.bf16.msra.mxu0 %v656
        %760 = vmatprep.subr.bf16.mxu0 %v653
        %761 = vmatpush2.bf16.msra.mxu0 %v652
        %762 = vmatprep.subr.bf16.mxu0 %v649
        %763 = vmatpush2.bf16.msra.mxu0 %v648
        %764 = vmatprep.subr.bf16.mxu0 %v645
        %765 = vmatpush2.bf16.msra.mxu0 %v644
        %766 = vmatprep.subr.bf16.mxu0 %v641
        %767 = vmatpush2.bf16.msra.mxu0 %v640
        %768 = vmatprep.mubr.bf16.mxu0 %v327
        %769 = vmatmul.mubr.bf16.gmra.mxu0 %v326
        %v770 = vpop.f32.mrf.mxu0
        %v771 = vadd.f32 %v399, %v770
        %v772 = vpop.f32.mrf.mxu0
        %v773 = vadd.f32 %v403, %v772
        %v774 = vpop.f32.mrf.mxu0
        %v775 = vpop.f32.mrf.mxu0
        %776 = vdwg.mxu0
        %777 = vmatprep.subr.bf16.mxu0 %v639
        %778 = vmatpush1.bf16.msra.mxu0 %v638
        %779 = vmatprep.subr.bf16.mxu0 %v635
        %780 = vmatpush1.bf16.msra.mxu0 %v634
        %781 = vmatprep.subr.bf16.mxu0 %v631
        %782 = vmatpush1.bf16.msra.mxu0 %v630
        %783 = vmatprep.subr.bf16.mxu0 %v627
        %784 = vmatpush1.bf16.msra.mxu0 %v626
        %785 = vmatprep.subr.bf16.mxu0 %v623
        %786 = vmatpush1.bf16.msra.mxu0 %v622
        %787 = vmatprep.subr.bf16.mxu0 %v619
        %788 = vmatpush1.bf16.msra.mxu0 %v618
        %789 = vmatprep.subr.bf16.mxu0 %v615
        %790 = vmatpush1.bf16.msra.mxu0 %v614
        %791 = vmatprep.subr.bf16.mxu0 %v611
        %792 = vmatpush1.bf16.msra.mxu0 %v610
        %793 = vmatprep.subr.bf16.mxu0 %v671
        %794 = vmatpush2.bf16.msra.mxu0 %v670
        %795 = vmatprep.subr.bf16.mxu0 %v667
        %796 = vmatpush2.bf16.msra.mxu0 %v666
        %797 = vmatprep.subr.bf16.mxu0 %v663
        %798 = vmatpush2.bf16.msra.mxu0 %v662
        %799 = vmatprep.subr.bf16.mxu0 %v659
        %800 = vmatpush2.bf16.msra.mxu0 %v658
        %801 = vmatprep.subr.bf16.mxu0 %v655
        %802 = vmatpush2.bf16.msra.mxu0 %v654
        %803 = vmatprep.subr.bf16.mxu0 %v651
        %804 = vmatpush2.bf16.msra.mxu0 %v650
        %805 = vmatprep.subr.bf16.mxu0 %v647
        %806 = vmatpush2.bf16.msra.mxu0 %v646
        %807 = vmatprep.subr.bf16.mxu0 %v643
        %808 = vmatpush2.bf16.msra.mxu0 %v642
        %809 = vmatprep.mubr.bf16.mxu0 %v327
        %810 = vmatmul.mubr.bf16.gmra.mxu0 %v326
        %v811 = vpop.f32.mrf.mxu0
        %v812 = vadd.f32 %v407, %v811
        %v813 = vpop.f32.mrf.mxu0
        %v814 = vadd.f32 %v411, %v813
        %v815 = vpop.f32.mrf.mxu0
        %v816 = vpop.f32.mrf.mxu0
        %817 = vdwg.mxu0
        %v818 = vmul.f32 %v771, 0.5
        %v819 = vtanh.pop %v818
        %v820 = vadd.f32 %v819, 1.0
        %v821 = vmul.f32 %v820, 0.5
        %v822 = vmul.f32 %v773, 0.5
        %v823 = vtanh.pop %v822
        %v824 = vadd.f32 %v823, 1.0
        %v825 = vmul.f32 %v824, 0.5
        %v826 = vtanh.pop %v812
        %v827 = vmul.f32 %v814, 0.5
        %v828 = vtanh.pop %v827
        %v829 = vadd.f32 %v828, 1.0
        %v830 = vmul.f32 %v829, 0.5
        %v831 = vmul.f32 %v825, %v323
        %v832 = vmul.f32 %v821, %v826
        %v833 = vadd.f32 %v831, %v832
        %v834 = vtanh.pop %v833
        %v835 = vmul.f32 %v830, %v834
        %836 = vst [vmem:[%s310] sm:$0xff] %v835
        %837 = vst [vmem:[%s314] sm:$0xff] %v833
        %s838 = sadd.s32 %s21, 1
        %p839 = scmp.lt.s32.totalorder %s838, 2
        // Predicated region
        $region49: #{stacked_lstm_forward_padded.1} parent=39 // pred_check
          %p840 = pneg %p839
        $region50: #{stacked_lstm_forward_padded.1} parent=39 // pred_check_branch
          %842 = sbr.rel (%p840) target = $region52
        $region51: #{stacked_lstm_forward_padded.1} parent=39 // pred_region
          %843 = vst [vmem:[#allocation2] sm:$0xff] %v835
        $region52: #{stacked_lstm_forward_padded.1} parent=39 // pred_fallthru
          _
        %p844 = scmp.lt.s32.totalorder %s21, 1
        %s845 = scalar_select %p844, %s21, 1
        %s846 = smul.addr %s845, 8
        %s847 = scalar_lea.vmem %s5, %s846
        %p848 = scmp.lt.s32.totalorder %s21, 1
        %s849 = scalar_select %p848, %s21, 1
        %s850 = smul.addr %s849, 8
        %s851 = scalar_lea.vmem %s6, %s850
        // Predicated region
        $region53: #{stacked_lstm_forward_padded.1} parent=39 // pred_check
          %p852 = pneg %p159
        $region54: #{stacked_lstm_forward_padded.1} parent=39 // pred_check_branch
          %854 = sbr.rel (%p852) target = $region56
        $region55: #{stacked_lstm_forward_padded.1} parent=39 // pred_region
          _
        $region56: #{stacked_lstm_forward_padded.1} parent=39 // pred_fallthru
          _
        // Predicated region
        $region57: #{stacked_lstm_forward_padded.1} parent=39 // pred_check
          %p855 = pneg %p185
        $region58: #{stacked_lstm_forward_padded.1} parent=39 // pred_check_branch
          %857 = sbr.rel (%p855) target = $region60
        $region59: #{stacked_lstm_forward_padded.1} parent=39 // pred_region
          _
        $region60: #{stacked_lstm_forward_padded.1} parent=39 // pred_fallthru
          _
      $region40: #{stacked_lstm_forward_padded.1} parent=5 // pred_fallthru
        _
      %p858 = scmp.le.s32.totalorder 2, %s16
      // Predicated region
      $region61: #{stacked_lstm_forward_padded.1} parent=5 // pred_check
        %p859 = pneg %p858
      $region62: #{stacked_lstm_forward_padded.1} parent=5 // pred_check_branch
        %861 = sbr.rel (%p859) target = $region64
      $region63: #{stacked_lstm_forward_padded.1} parent=5 // pred_region
        %s862 = ssub.s32 %s16, 2
        // Predicated region
        $region65: #{stacked_lstm_forward_padded.1} parent=63 // pred_check
          %p863 = pneg %p165
        $region66: #{stacked_lstm_forward_padded.1} parent=63 // pred_check_branch
          %865 = sbr.rel (%p863) target = $region68
        $region67: #{stacked_lstm_forward_padded.1} parent=63 // pred_region
          %p866 = scmp.lt.s32.totalorder %s22, 1
          %s867 = scalar_select %p866, %s22, 1
          %s868 = smul.addr %s867, 8
          %s869 = scalar_lea.vmem %s5, %s868
        $region68: #{stacked_lstm_forward_padded.1} parent=63 // pred_fallthru
          _
        // Predicated region
        $region69: #{stacked_lstm_forward_padded.1} parent=63 // pred_check
          %p870 = pneg %p191
        $region70: #{stacked_lstm_forward_padded.1} parent=63 // pred_check_branch
          %872 = sbr.rel (%p870) target = $region72
        $region71: #{stacked_lstm_forward_padded.1} parent=63 // pred_region
          %p873 = scmp.lt.s32.totalorder %s22, 1
          %s874 = scalar_select %p873, %s22, 1
          %s875 = smul.addr %s874, 8
          %s876 = scalar_lea.vmem %s6, %s875
        $region72: #{stacked_lstm_forward_padded.1} parent=63 // pred_fallthru
          _
      $region64: #{stacked_lstm_forward_padded.1} parent=5 // pred_fallthru
        _
    $region6: #{stacked_lstm_forward_padded.1} parent=1 // loop_footer
      %s20 = sadd.s32 1, %s16
    $region7: #{stacked_lstm_forward_padded.1} parent=1 // loop_footer_branch
      %15 = sbr.rel target = $region3
    $region8: #{stacked_lstm_forward_padded.1} parent=1 // loop_exit
      _
    %877 = vsyncpa [#allocation4], 1
    %s878 = scalar_lea.sflag [#allocation4], 1
    %879 = vsyncpa %s878, 1

</llo_original>
